<compile_context>
chip_gen: v6e
topology: v6e:2x2x1
jax: 0.10.0
libtpu: 0.0.40
codegen_flags: <defaults>
</compile_context>

<pallas_src>
import jax
import jax.numpy as jnp
from jax.experimental import pallas as pl
from jax.experimental.pallas import tpu as pltpu


def _round_up(x, m):
    return ((x + m - 1) // m) * m


def residual_linear_kernel(x_ref, w_ref, b_ref, o_ref):
    """One (row-tile, col-tile): out = x @ W[:, cols] + b[cols] + x[:, cols]."""
    j = pl.program_id(1)
    tn = o_ref.shape[-1]

    x = x_ref[...]                                   # (tm, D) row block (resident over j)
    # MXU matmul in the input dtype with f32 accumulation.
    y = jnp.dot(x, w_ref[...], preferred_element_type=jnp.float32)

    # Residual slice of x matching this output-column tile (lane-aligned start).
    col0 = pl.multiple_of(j * tn, tn)
    y = y + x_ref[:, pl.ds(col0, tn)].astype(jnp.float32)
    y = y + b_ref[...].astype(jnp.float32)
    o_ref[...] = y.astype(o_ref.dtype)               # single downcast on store


def residual_linear_forward(x, w, b, *, tm=None, tn=None):
    """Residual(Linear): out = x @ w + b + x.

    x: [B, T, D]; w: [D, D] stored as [D_in, D_out]; b: [D].
    """
    B, T, D = x.shape
    M = B * T
    tm_user = tm is not None

    # Normalize parameter dtypes: bf16 activations -> bf16 weights/bias
    # (halves weight DMA + VMEM residency, keeps MXU on the bf16 path).
    if x.dtype == jnp.bfloat16 and w.dtype != jnp.bfloat16:
        w = w.astype(jnp.bfloat16)
        b = b.astype(jnp.bfloat16)

    x2 = x.reshape(M, D)          # bitcast reshape, no HBM pass
    b2 = b.reshape(1, D)

    x_is = jnp.dtype(x.dtype).itemsize
    w_is = jnp.dtype(w.dtype).itemsize
    row_align = 8 if x_is >= 4 else 16

    # Generation-aware VMEM budget (v5e/v6e: 128 MiB, v7x: 64 MiB per core).
    try:
        vmem_cap = int(pltpu.get_tpu_info().vmem_capacity_bytes)
    except Exception:
        vmem_cap = 64 * 1024 * 1024          # conservative fallback (v7x-sized)
    budget = int(vmem_cap * 0.45)            # block buffers + f32 temporaries
    vmem_limit = int(vmem_cap * 0.85)        # explicit scoped limit for Mosaic

    def working_set(tm_, tn_, w_bufs):
        return (2 * tm_ * D * x_is           # x row block, double-buffered
                + w_bufs * D * tn_ * w_is    # weight slab
                + w_bufs * tn_ * w_is        # bias slab
                + 2 * tm_ * tn_ * x_is       # output block, double-buffered
                + 2 * tm_ * tn_ * 4)         # f32 y + f32 residual upcast

    # ---- tile selection --------------------------------------------------
    tm_max = min(1024 if D <= 1024 else 512, _round_up(M, row_align))
    tm_max = max(row_align, _round_up(tm_max, row_align))
    tm_floor = max(row_align, min(256, tm_max))

    if tm is None or tn is None:
        # Candidate column tiles: whole D first (weight resident, fetched once),
        # then divisors of D that are multiples of 128 (streamed slabs).
        cands = [D] + [c for c in (2048, 1024, 512, 256, 128)
                       if c < D and D % c == 0]
        sel_tm, sel_tn, fits = tm_floor, cands[-1], False
        for cand in cands:
            w_bufs = 1 if cand == D else 2
            t = tm_max
            while t > tm_floor and working_set(t, cand, w_bufs) > budget:
                t = max(tm_floor, _round_up(t // 2, row_align))
            if working_set(t, cand, w_bufs) <= budget:
                sel_tm, sel_tn, fits = t, cand, True
                break
        if not fits:
            sel_tn = cands[-1]
            sel_tm = tm_floor
        if tm is None:
            tm = sel_tm
        if tn is None:
            tn = sel_tn

    # Column tile must be the whole D or a 128-multiple divisor of D (keeps the
    # in-kernel residual slice lane-aligned and in-bounds).
    assert tn == D or (D % tn == 0 and tn % 128 == 0), (tn, D)

    tm = max(row_align, _round_up(min(tm, _round_up(M, row_align)), row_align))
    n_j = pl.cdiv(D, tn)

    # Keep >= 2 row steps when possible so the "parallel" axis can be split
    # across TensorCores (v7x megacore); skip if the caller pinned tm.
    if not tm_user and pl.cdiv(M, tm) == 1 and M > row_align:
        tm = max(row_align, _round_up(pl.cdiv(M, 2), row_align))
    n_i = pl.cdiv(M, tm)

    # Constant block index (whole weight resident) -> single buffer.
    w_mode = pl.Buffered(1) if n_j == 1 else None

    cost = pl.CostEstimate(
        flops=2 * M * D * D,
        bytes_accessed=(2 * M * D) * x_is + (D * D + D) * w_is,
        transcendentals=0,
    )

    out2 = pl.pallas_call(
        residual_linear_kernel,
        out_shape=jax.ShapeDtypeStruct((M, D), x.dtype),
        grid_spec=pl.GridSpec(
            grid=(n_i, n_j),                  # columns innermost: x block stays resident
            in_specs=[
                pl.BlockSpec((tm, D), lambda i, j: (i, 0)),              # x rows (streamed over i)
                pl.BlockSpec((D, tn), lambda i, j: (0, j),
                             pipeline_mode=w_mode),                       # weight slab
                pl.BlockSpec((1, tn), lambda i, j: (0, j),
                             pipeline_mode=w_mode),                       # bias slab
            ],
            out_specs=pl.BlockSpec((tm, tn), lambda i, j: (i, j)),
        ),
        compiler_params=pltpu.CompilerParams(
            dimension_semantics=("parallel", "arbitrary"),
            vmem_limit_bytes=vmem_limit,
        ),
        cost_estimate=cost,
    )(x2, w, b2)

    return out2.reshape(B, T, D)


if __name__ == "__main__":
    key = jax.random.PRNGKey(0)
    kx, kw, kb = jax.random.split(key, 3)

    # Small transformer-residual-like shapes: batch=2, seq=8, hidden=128.
    B, T, D = 2, 8, 128
    x = jax.random.normal(kx, (B, T, D), dtype=jnp.float32)
    # Deterministic parameter init (nn.Linear-style scaling).
    w = jax.random.normal(kw, (D, D), dtype=jnp.float32) * (1.0 / jnp.sqrt(D))
    b = jax.random.normal(kb, (D,), dtype=jnp.float32) * 0.01

    out = residual_linear_forward(x, w, b)
    jax.block_until_ready(out)

    # Pure-JAX reference of Residual semantics: fn(x) + x.
    ref = jnp.einsum("btd,de->bte", x, w) + b + x
    assert out.shape == ref.shape
    assert jnp.allclose(out, ref, atol=2e-3, rtol=2e-3)

    # Ragged-M path: 200 rows with tm=64 -> 4 row tiles, last tile masked
    # inside the kernel (no host-side pad/slice passes).
    B2, T2 = 2, 100
    x_big = jax.random.normal(kx, (B2, T2, D), dtype=jnp.float32)
    out_big = residual_linear_forward(x_big, w, b, tm=64)
    jax.block_until_ready(out_big)
    ref_big = jnp.einsum("btd,de->bte", x_big, w) + b + x_big
    assert jnp.allclose(out_big, ref_big, atol=2e-3, rtol=2e-3)

    # N-tiled path: D=256 with tn=128 -> 2 column tiles, streamed weight slabs
    # and the in-kernel lane-aligned residual slice.
    D3 = 256
    x3 = jax.random.normal(kx, (2, 16, D3), dtype=jnp.float32)
    w3 = jax.random.normal(kw, (D3, D3), dtype=jnp.float32) * (1.0 / jnp.sqrt(D3))
    b3 = jax.random.normal(kb, (D3,), dtype=jnp.float32) * 0.01
    out3 = residual_linear_forward(x3, w3, b3, tm=32, tn=128)
    jax.block_until_ready(out3)
    ref3 = jnp.einsum("btd,de->bte", x3, w3) + b3 + x3
    assert jnp.allclose(out3, ref3, atol=2e-3, rtol=2e-3)

    print("KERNEL_OK")
</pallas_src>

<mosaic_0001>
module attributes {stable_mosaic.version = 11 : i64} {
  func.func @residual_linear_kernel(%arg0: i32, %arg1: i32, %arg2: memref<8x128xf32, #tpu.memory_space<vmem>>, %arg3: memref<128x128xf32, #tpu.memory_space<vmem>>, %arg4: memref<1x128xf32, #tpu.memory_space<vmem>>, %arg5: memref<8x128xf32, #tpu.memory_space<vmem>>) attributes {dimension_semantics = [#tpu.dimension_semantics<parallel>, #tpu.dimension_semantics<arbitrary>], iteration_bounds = array<i64: 2, 1>, scalar_prefetch = 0 : i64, scratch_operands = 0 : i64, tpu.core_type = #tpu.core_type<tc>, window_params = [{transform_indices = @transform_0, window_bounds = array<i64: 8, 128>}, {pipeline_mode = #tpu.pipeline_mode<synchronous>, transform_indices = @transform_1, window_bounds = array<i64: 128, 128>}, {pipeline_mode = #tpu.pipeline_mode<synchronous>, transform_indices = @transform_2, window_bounds = array<i64: 1, 128>}, {transform_indices = @transform_3, window_bounds = array<i64: 8, 128>}]} {
    %c0 = arith.constant 0 : index
    %c0_0 = arith.constant 0 : index
    %0 = vector.load %arg2[%c0, %c0_0] : memref<8x128xf32, #tpu.memory_space<vmem>>, vector<8x128xf32>
    %c0_1 = arith.constant 0 : index
    %c0_2 = arith.constant 0 : index
    %1 = vector.load %arg3[%c0_1, %c0_2] : memref<128x128xf32, #tpu.memory_space<vmem>>, vector<128x128xf32>
    %cst = arith.constant dense<0.000000e+00> : vector<8x128xf32>
    %2 = tpu.matmul %0, %1, %cst {dimension_numbers = #tpu.dot_dimension_numbers<[1], [0], [0], [1], [0, 0, 1, 1], [], []>} : vector<8x128xf32>, vector<128x128xf32>, vector<8x128xf32> -> vector<8x128xf32>
    %c128_i32 = arith.constant 128 : i32
    %3 = arith.muli %arg1, %c128_i32 : i32
    %4 = tpu.assume_multiple %3, 128 : i32
    %c0_3 = arith.constant 0 : index
    %5 = arith.index_cast %4 : i32 to index
    %6 = vector.load %arg2[%c0_3, %5] : memref<8x128xf32, #tpu.memory_space<vmem>>, vector<8x128xf32>
    %7 = arith.addf %2, %6 : vector<8x128xf32>
    %c0_4 = arith.constant 0 : index
    %c0_5 = arith.constant 0 : index
    %8 = vector.load %arg4[%c0_4, %c0_5] : memref<1x128xf32, #tpu.memory_space<vmem>>, vector<1x128xf32>
    %9 = vector.broadcast %8 : vector<1x128xf32> to vector<8x128xf32>
    %10 = arith.addf %7, %9 : vector<8x128xf32>
    %c0_6 = arith.constant 0 : index
    %c0_7 = arith.constant 0 : index
    %11 = vector.load %arg5[%c0_6, %c0_7] : memref<8x128xf32, #tpu.memory_space<vmem>>, vector<8x128xf32>
    tpu.vector_store %arg5[%c0_6, %c0_7], %10 {strides = array<i32>} : memref<8x128xf32, #tpu.memory_space<vmem>>, vector<8x128xf32>,
    return
  }
  func.func @transform_0(%arg0: i32, %arg1: i32) -> (i32, i32) {
    %c0_i32 = arith.constant 0 : i32
    %c0_i32_0 = arith.constant 0 : i32
    return %arg0, %c0_i32 : i32, i32
  }
  func.func @transform_1(%arg0: i32, %arg1: i32) -> (i32, i32) {
    %c0_i32 = arith.constant 0 : i32
    %c0_i32_0 = arith.constant 0 : i32
    return %c0_i32, %arg1 : i32, i32
  }
  func.func @transform_2(%arg0: i32, %arg1: i32) -> (i32, i32) {
    %c0_i32 = arith.constant 0 : i32
    %c0_i32_0 = arith.constant 0 : i32
    return %c0_i32, %arg1 : i32, i32
  }
  func.func @transform_3(%arg0: i32, %arg1: i32) -> (i32, i32) {
    %c0_i32 = arith.constant 0 : i32
    return %arg0, %arg1 : i32, i32
  }
}

</mosaic_0001>

<llo_original>
// kernel: tpu_custom_call.1
$region0: #{tpu_custom_call.1}
  #allocation0 [shape = 'u32[]', space=smem, size = 0x4, offset = 0x4, fixed_abs, tag = 'smem constant byte address 0x4 - core index']
  #allocation1 [shape = 'u32[144,128]{1,0:T(1,128)}', space=vmem, size = 0x12000, scoped, tag = 'internal scratch']
  %s0 = inlined_call_operand.hbm [shape: f32[16,128], index: 0, kind: input, shape index: {}]
  %s1 = inlined_call_operand.hbm [shape: f32[128,128], index: 1, kind: input, shape index: {}]
  %s2 = inlined_call_operand.vmem [shape: f32[1,128], index: 2, kind: input, shape index: {}]
  %s3 = inlined_call_operand.hbm [shape: f32[16,128], index: 3, kind: output, shape index: {}]
  %s4 = sld [smem:[#allocation0]]
  $region53: #{tpu_custom_call.1} parent=0
    _
  %s6 = ssub.s32 1, %s4
  %s7 = scalar_select 0, %s6, %s4
  $region1: #{tpu_custom_call.1} parent=0
    #allocation2 [shape = 'u8[8192]{0}', space=vmem, size = 0x2000, scoped, tag = 'input window, operand 0']
    #allocation3 [shape = 's32[2]{0}', space=sflag, size = 0x8, scoped, tag = 'scoped memory for tpu_custom_call.1']
    #allocation4 [shape = 's32[2]{0}', space=sflag, size = 0x8, scoped, tag = 'scoped memory for tpu_custom_call.1']
    #allocation5 [shape = 'u8[65536]{0}', space=vmem, size = 0x10000, scoped, tag = 'input window, operand 1, single buffered']
    #allocation6 [shape = 's32[1]{0}', space=sflag, size = 0x4, scoped, tag = 'scoped memory for tpu_custom_call.1']
    #allocation7 [shape = 'u8[8192]{0}', space=vmem, size = 0x2000, scoped, tag = 'output window, operand 0']
    %8 = vsyncpa [#allocation3], 0
    %s9 = scalar_lea.sflag [#allocation3], 1
    %10 = vsyncpa %s9, 0
    %11 = vsyncpa [#allocation6], 0
    %12 = vsyncpa [#allocation4], 0
    %s13 = scalar_lea.sflag [#allocation4], 1
    %14 = vsyncpa %s13, 0
    loop: start=0, step=1, limit=4
    $region2: #{tpu_custom_call.1} parent=1 // loop_pre_header
      _
    $region3: #{tpu_custom_call.1} parent=1 // loop_header
      %s16 = sphi 0, %s20
      %p17 = scmp.ge.s32.totalorder %s16, 4
      %s23 = sphi 0, %s35
      %s24 = sphi 0, %s31
      %s25 = sphi 0, %s23
      %s26 = sphi 0, %s24
      %s27 = sphi 0, %s25
      %s28 = sphi 0, %s26
      %s38 = sphi 0, %s40
      %s41 = sphi 0, %s38
      %s42 = sphi 0, %s41
      %s58 = sphi 0, %s42
      %s64 = sphi 0, %s66
      %s67 = sphi 0, %s64
      %s68 = sphi 0, %s67
      %s84 = sphi 0, %s68
      %s90 = sphi 0, %s92
      %s93 = sphi 0, %s90
      %s94 = sphi 0, %s93
      %s110 = sphi 0, %s94
      %s118 = sphi 0, %s120
      %s121 = sphi 0, %s118
      %s122 = sphi 0, %s121
      %s138 = sphi 0, %s122
    $region4: #{tpu_custom_call.1} parent=1 // loop_header_branch
      %19 = sbr.rel (%p17) target = $region8
    $region5: #{tpu_custom_call.1} parent=1 // loop_body
      %s21 = ssub.s32 %s16, 1
      %s22 = ssub.s32 %s16, 2
      %s29 = sadd.s32 1, %s24
      %p30 = scmp.ge.s32.totalorder %s29, 1
      %s31 = scalar_select %p30, 0, %s29
      %s32 = sadd.s32 1, %s23
      %s33 = scalar_select %p30, %s32, %s23
      %p34 = scmp.ge.s32.totalorder %s33, 2
      %s35 = scalar_select %p34, 0, %s33
      %s36 = ssub.s32 %s23, %s35
      %p37 = scmp.eq.s32.totalorder %s36, 0
      %s39 = sadd.s32 %s38, 1
      %s40 = scalar_select %p37, %s38, %s39
      %p43 = pneg %p37
      %p44 = scmp.eq.s32.totalorder %s16, 1
      %p45 = por %p43, %p44
      %p46 = scmp.ne.s32.totalorder %s38, %s41
      %p47 = scmp.eq.s32.totalorder %s16, 0
      %p48 = por %p46, %p47
      %p49 = scmp.ne.s32.totalorder %s38, %s41
      %p50 = scmp.eq.s32.totalorder %s21, 1
      %p51 = por %p49, %p50
      %p52 = scmp.ne.s32.totalorder %s41, %s42
      %p53 = scmp.eq.s32.totalorder %s21, 0
      %p54 = por %p52, %p53
      %p55 = scmp.ne.s32.totalorder %s41, %s42
      %p56 = scmp.eq.s32.totalorder %s22, 1
      %p57 = por %p55, %p56
      %p59 = scmp.ne.s32.totalorder %s42, %s58
      %p60 = scmp.eq.s32.totalorder %s22, 0
      %p61 = por %p59, %p60
      %s62 = ssub.s32 %s24, %s31
      %p63 = scmp.eq.s32.totalorder %s62, 0
      %s65 = sadd.s32 %s64, 1
      %s66 = scalar_select %p63, %s64, %s65
      %p69 = pneg %p63
      %p70 = scmp.eq.s32.totalorder %s16, 1
      %p71 = por %p69, %p70
      %p72 = scmp.ne.s32.totalorder %s64, %s67
      %p73 = scmp.eq.s32.totalorder %s16, 0
      %p74 = por %p72, %p73
      %p75 = scmp.ne.s32.totalorder %s64, %s67
      %p76 = scmp.eq.s32.totalorder %s21, 1
      %p77 = por %p75, %p76
      %p78 = scmp.ne.s32.totalorder %s67, %s68
      %p79 = scmp.eq.s32.totalorder %s21, 0
      %p80 = por %p78, %p79
      %p81 = scmp.ne.s32.totalorder %s67, %s68
      %p82 = scmp.eq.s32.totalorder %s22, 1
      %p83 = por %p81, %p82
      %p85 = scmp.ne.s32.totalorder %s68, %s84
      %p86 = scmp.eq.s32.totalorder %s22, 0
      %p87 = por %p85, %p86
      %s88 = ssub.s32 %s24, %s31
      %p89 = scmp.eq.s32.totalorder %s88, 0
      %s91 = sadd.s32 %s90, 1
      %s92 = scalar_select %p89, %s90, %s91
      %p95 = pneg %p89
      %p96 = scmp.eq.s32.totalorder %s16, 1
      %p97 = por %p95, %p96
      %p98 = scmp.ne.s32.totalorder %s90, %s93
      %p99 = scmp.eq.s32.totalorder %s16, 0
      %p100 = por %p98, %p99
      %p101 = scmp.ne.s32.totalorder %s90, %s93
      %p102 = scmp.eq.s32.totalorder %s21, 1
      %p103 = por %p101, %p102
      %p104 = scmp.ne.s32.totalorder %s93, %s94
      %p105 = scmp.eq.s32.totalorder %s21, 0
      %p106 = por %p104, %p105
      %p107 = scmp.ne.s32.totalorder %s93, %s94
      %p108 = scmp.eq.s32.totalorder %s22, 1
      %p109 = por %p107, %p108
      %p111 = scmp.ne.s32.totalorder %s94, %s110
      %p112 = scmp.eq.s32.totalorder %s22, 0
      %p113 = por %p111, %p112
      %s114 = ssub.s32 %s23, %s35
      %s115 = ssub.s32 %s24, %s31
      %s116 = sor.u32 %s114, %s115
      %p117 = scmp.eq.s32.totalorder %s116, 0
      %s119 = sadd.s32 %s118, 1
      %s120 = scalar_select %p117, %s118, %s119
      %p123 = pneg %p117
      %p124 = scmp.eq.s32.totalorder %s16, 1
      %p125 = por %p123, %p124
      %p126 = scmp.ne.s32.totalorder %s118, %s121
      %p127 = scmp.eq.s32.totalorder %s16, 0
      %p128 = por %p126, %p127
      %p129 = scmp.ne.s32.totalorder %s118, %s121
      %p130 = scmp.eq.s32.totalorder %s21, 1
      %p131 = por %p129, %p130
      %p132 = scmp.ne.s32.totalorder %s121, %s122
      %p133 = scmp.eq.s32.totalorder %s21, 0
      %p134 = por %p132, %p133
      %p135 = scmp.ne.s32.totalorder %s121, %s122
      %p136 = scmp.eq.s32.totalorder %s22, 1
      %p137 = por %p135, %p136
      %p139 = scmp.ne.s32.totalorder %s122, %s138
      %p140 = scmp.eq.s32.totalorder %s22, 0
      %p141 = por %p139, %p140
      %p142 = scmp.le.s32.totalorder 1, %s16
      %p143 = scmp.lt.s32.totalorder %s16, 3
      %p144 = pnand %p142, %p143
      %p145 = pneg %p144
      // Predicated region
      $region9: #{tpu_custom_call.1} parent=5 // pred_check
        _
      $region10: #{tpu_custom_call.1} parent=5 // pred_check_branch
        %147 = sbr.rel (%p144) target = $region12
      $region11: #{tpu_custom_call.1} parent=5 // pred_region
        %s148 = ssub.s32 %s16, 1
        // Predicated region
        $region13: #{tpu_custom_call.1} parent=11 // pred_check
          %p149 = pneg %p80
        $region14: #{tpu_custom_call.1} parent=11 // pred_check_branch
          %151 = sbr.rel (%p149) target = $region16
        $region15: #{tpu_custom_call.1} parent=11 // pred_region
          %s153 = ssub.s32 2048, 2048
          %154 = vsyncadd [#allocation6], %s153
          %s155 = smul.addr %s26, 128
          %s156 = scalar_lea.hbm %s1, %s155
          %s157 = sshll.u32 [#allocation5], 4
          %s158 = int_to_ptr.vmem [resolvable:$true] %s157
          %163 = dma.hbm_to_vmem [thread:$0]  %s156, 2048, %s158, [#allocation6], 128, 128, 8
        $region16: #{tpu_custom_call.1} parent=11 // pred_fallthru
          _
        // Predicated region
        $region17: #{tpu_custom_call.1} parent=11 // pred_check
          %p164 = pneg %p106
        $region18: #{tpu_custom_call.1} parent=11 // pred_check_branch
          %166 = sbr.rel (%p164) target = $region20
        $region19: #{tpu_custom_call.1} parent=11 // pred_region
          %p167 = scmp.lt.s32.totalorder %s26, 0
          %s168 = scalar_select %p167, %s26, 0
          %s169 = scalar_lea.vmem %s2, %s168
        $region20: #{tpu_custom_call.1} parent=11 // pred_fallthru
          _
      $region12: #{tpu_custom_call.1} parent=5 // pred_fallthru
        _
      %p170 = scmp.lt.s32.totalorder %s16, 2
      // Predicated region
      $region21: #{tpu_custom_call.1} parent=5 // pred_check
        %p171 = pneg %p170
      $region22: #{tpu_custom_call.1} parent=5 // pred_check_branch
        %173 = sbr.rel (%p171) target = $region24
      $region23: #{tpu_custom_call.1} parent=5 // pred_region
        // Predicated region
        $region25: #{tpu_custom_call.1} parent=23 // pred_check
          %p174 = pneg %p48
        $region26: #{tpu_custom_call.1} parent=23 // pred_check_branch
          %176 = sbr.rel (%p174) target = $region28
        $region27: #{tpu_custom_call.1} parent=23 // pred_region
          %s177 = sand.u32 %s38, 1
          %s178 = scalar_lea.sflag [#allocation3], %s177
          %s179 = sand.u32 %s38, 1
          %s180 = smul.addr %s179, 8
          %s181 = scalar_lea.vmem [#allocation2], %s180
          %s183 = ssub.s32 128, 128
          %184 = vsyncadd %s178, %s183
          %s185 = smul.addr %s23, 128
          %s186 = scalar_lea.hbm %s0, %s185
          %s188 = sshll.u32 %s181, 4
          %s189 = int_to_ptr.vmem [resolvable:$true] %s188
          %191 = dma.hbm_to_vmem [thread:$0]  %s186, 128, %s189, %s178
        $region28: #{tpu_custom_call.1} parent=23 // pred_fallthru
          _
      $region24: #{tpu_custom_call.1} parent=5 // pred_fallthru
        _
      %p192 = scmp.le.s32.totalorder 1, %s16
      %p193 = scmp.lt.s32.totalorder %s16, 3
      %p194 = pnand %p192, %p193
      %p195 = pneg %p194
      // Predicated region
      $region29: #{tpu_custom_call.1} parent=5 // pred_check
        _
      $region30: #{tpu_custom_call.1} parent=5 // pred_check_branch
        %197 = sbr.rel (%p194) target = $region32
      $region31: #{tpu_custom_call.1} parent=5 // pred_region
        %s198 = ssub.s32 %s16, 1
        %s199 = sand.u32 %s41, 1
        %s200 = scalar_lea.sflag [#allocation3], %s199
        %s201 = sand.u32 %s41, 1
        %s202 = smul.addr %s201, 8
        %s203 = scalar_lea.vmem [#allocation2], %s202
        // Predicated region
        $region33: #{tpu_custom_call.1} parent=31 // pred_check
          %p204 = pneg %p54
        $region34: #{tpu_custom_call.1} parent=31 // pred_check_branch
          %206 = sbr.rel (%p204) target = $region36
        $region35: #{tpu_custom_call.1} parent=31 // pred_region
          %207 = dma.done %s200, 128
        $region36: #{tpu_custom_call.1} parent=31 // pred_fallthru
          _
        // Predicated region
        $region37: #{tpu_custom_call.1} parent=31 // pred_check
          %p208 = pneg %p80
        $region38: #{tpu_custom_call.1} parent=31 // pred_check_branch
          %210 = sbr.rel (%p208) target = $region40
        $region39: #{tpu_custom_call.1} parent=31 // pred_region
          %211 = dma.done [#allocation6], 2048
        $region40: #{tpu_custom_call.1} parent=31 // pred_fallthru
          _
        %s212 = sand.u32 %s41, 1
        %s213 = scalar_lea.sflag [#allocation3], %s212
        %s214 = sand.u32 %s41, 1
        %s215 = smul.addr %s214, 8
        %s216 = scalar_lea.vmem [#allocation2], %s215
        %p217 = pneg %p54
        %p218 = pneg %p51
        %p219 = pneg %p80
        %p220 = pneg %p77
        %p221 = scmp.lt.s32.totalorder %s26, 0
        %s222 = scalar_select %p221, %s26, 0
        %s223 = scalar_lea.vmem %s2, %s222
        %p224 = pneg %p106
        %p225 = pneg %p103
        %p226 = pneg %p134
        %p227 = pneg %p131
        %s228 = sand.u32 %s121, 1
        %s229 = scalar_lea.sflag [#allocation4], %s228
        %s230 = sand.u32 %s121, 1
        %s231 = smul.addr %s230, 8
        %s232 = scalar_lea.vmem [#allocation7], %s231
        %p233 = scmp.lt.s32.totalorder %s26, 0
        %s234 = scalar_select %p233, %s26, 0
        %s235 = scalar_lea.vmem %s2, %s234
        %v236 = vld [vmem:[%s203] sm:$0xff]
        %v237 = vld [vmem:[#allocation5] sm:$0xff]
        %v238 = vld [vmem:[#allocation5 + $0x8] sm:$0xff]
        %v239 = vld [vmem:[#allocation5 + $0x10] sm:$0xff]
        %v240 = vld [vmem:[#allocation5 + $0x18] sm:$0xff]
        %v241 = vld [vmem:[#allocation5 + $0x20] sm:$0xff]
        %v242 = vld [vmem:[#allocation5 + $0x28] sm:$0xff]
        %v243 = vld [vmem:[#allocation5 + $0x30] sm:$0xff]
        %v244 = vld [vmem:[#allocation5 + $0x38] sm:$0xff]
        %v245 = vld [vmem:[#allocation5 + $0x40] sm:$0xff]
        %v246 = vld [vmem:[#allocation5 + $0x48] sm:$0xff]
        %v247 = vld [vmem:[#allocation5 + $0x50] sm:$0xff]
        %v248 = vld [vmem:[#allocation5 + $0x58] sm:$0xff]
        %v249 = vld [vmem:[#allocation5 + $0x60] sm:$0xff]
        %v250 = vld [vmem:[#allocation5 + $0x68] sm:$0xff]
        %v251 = vld [vmem:[#allocation5 + $0x70] sm:$0xff]
        %v252 = vld [vmem:[#allocation5 + $0x78] sm:$0xff]
        %s253 = smul.u32 %s26, 128
        %s254 = sshra.s32 %s253, 7
        %s255 = sand.u32 %s253, 127
        %s256 = scalar_lea.vmem %s203, %s254 [#allocation2]
        %v257 = vld [vmem:[%s256] sm:$0xff]
        %258 = vmatprep.subr.mxu0 0.0
        %259 = vmatpush1.msra.mxu0 %v252
        %260 = vmatprep.subr.mxu0 0.0
        %261 = vmatpush1.msra.mxu0 %v251
        %262 = vmatprep.subr.mxu0 0.0
        %263 = vmatpush1.msra.mxu0 %v250
        %264 = vmatprep.subr.mxu0 0.0
        %265 = vmatpush1.msra.mxu0 %v249
        %266 = vmatprep.subr.mxu0 0.0
        %267 = vmatpush1.msra.mxu0 %v248
        %268 = vmatprep.subr.mxu0 0.0
        %269 = vmatpush1.msra.mxu0 %v247
        %270 = vmatprep.subr.mxu0 0.0
        %271 = vmatpush1.msra.mxu0 %v246
        %272 = vmatprep.subr.mxu0 0.0
        %273 = vmatpush1.msra.mxu0 %v245
        %274 = vmatprep.subr.mxu0 0.0
        %275 = vmatpush1.msra.mxu0 %v244
        %276 = vmatprep.subr.mxu0 0.0
        %277 = vmatpush1.msra.mxu0 %v243
        %278 = vmatprep.subr.mxu0 0.0
        %279 = vmatpush1.msra.mxu0 %v242
        %280 = vmatprep.subr.mxu0 0.0
        %281 = vmatpush1.msra.mxu0 %v241
        %282 = vmatprep.subr.mxu0 0.0
        %283 = vmatpush1.msra.mxu0 %v240
        %284 = vmatprep.subr.mxu0 0.0
        %285 = vmatpush1.msra.mxu0 %v239
        %286 = vmatprep.subr.mxu0 0.0
        %287 = vmatpush1.msra.mxu0 %v238
        %288 = vmatprep.subr.mxu0 0.0
        %289 = vmatpush1.msra.mxu0 %v237
        %290 = vmatprep.subr.mxu0 0.0
        %291 = vmatpush2.msra.mxu0 0.0
        %292 = vmatprep.subr.mxu0 0.0
        %293 = vmatpush2.msra.mxu0 0.0
        %294 = vmatprep.subr.mxu0 0.0
        %295 = vmatpush2.msra.mxu0 0.0
        %296 = vmatprep.subr.mxu0 0.0
        %297 = vmatpush2.msra.mxu0 0.0
        %298 = vmatprep.subr.mxu0 0.0
        %299 = vmatpush2.msra.mxu0 0.0
        %300 = vmatprep.subr.mxu0 0.0
        %301 = vmatpush2.msra.mxu0 0.0
        %302 = vmatprep.subr.mxu0 0.0
        %303 = vmatpush2.msra.mxu0 0.0
        %304 = vmatprep.subr.mxu0 0.0
        %305 = vmatpush2.msra.mxu0 0.0
        %306 = vmatprep.subr.mxu0 0.0
        %307 = vmatpush2.msra.mxu0 0.0
        %308 = vmatprep.subr.mxu0 0.0
        %309 = vmatpush2.msra.mxu0 0.0
        %310 = vmatprep.subr.mxu0 0.0
        %311 = vmatpush2.msra.mxu0 0.0
        %312 = vmatprep.subr.mxu0 0.0
        %313 = vmatpush2.msra.mxu0 0.0
        %314 = vmatprep.subr.mxu0 0.0
        %315 = vmatpush2.msra.mxu0 0.0
        %316 = vmatprep.subr.mxu0 0.0
        %317 = vmatpush2.msra.mxu0 0.0
        %318 = vmatprep.subr.mxu0 0.0
        %319 = vmatpush2.msra.mxu0 0.0
        %320 = vmatprep.subr.mxu0 0.0
        %321 = vmatpush2.msra.mxu0 0.0
        %322 = vmatprep.mubr.f32.mxu0 0.0
        %323 = vmatmul.mubr.f32.gmra.mxu0 %v236
        %v324 = vpop.f32.mrf.mxu0
        %v325 = vadd.f32 %v257, %v324
        %v326 = vpop.f32.mrf.mxu0
        %327 = vdwg.mxu0
        %v328 = vld [vmem:[%s235] sm:$0x1]
        %v330 = vlaneseq
        %v331 = vshrl.u32 %v330, 7
        %v332 = vsub.s32 0, %v331
        %v333 = vrot.slane %v328, %v332
        %v335 = vadd.f32 %v325, %v333
        %336 = vst [vmem:[%s232] sm:$0xff] %v335
        %s337 = sand.u32 %s121, 1
        %s338 = scalar_lea.sflag [#allocation4], %s337
        %s339 = sand.u32 %s121, 1
        %s340 = smul.addr %s339, 8
        %s341 = scalar_lea.vmem [#allocation7], %s340
        // Predicated region
        $region41: #{tpu_custom_call.1} parent=31 // pred_check
          %p342 = pneg %p131
        $region42: #{tpu_custom_call.1} parent=31 // pred_check_branch
          %344 = sbr.rel (%p342) target = $region44
        $region43: #{tpu_custom_call.1} parent=31 // pred_region
          %s346 = ssub.s32 128, 128
          %347 = vsyncadd %s338, %s346
          %s348 = sadd.s32 %s26, %s25
          %s349 = smul.addr %s348, 128
          %s350 = scalar_lea.hbm %s3, %s349
          %s352 = sshll.u32 %s341, 4
          %s353 = int_to_ptr.vmem [resolvable:$true] %s352
          %355 = dma.vmem_to_hbm [thread:$0]  %s353, 128, %s350, %s338
        $region44: #{tpu_custom_call.1} parent=31 // pred_fallthru
          _
      $region32: #{tpu_custom_call.1} parent=5 // pred_fallthru
        _
      %p356 = scmp.le.s32.totalorder 2, %s16
      // Predicated region
      $region45: #{tpu_custom_call.1} parent=5 // pred_check
        %p357 = pneg %p356
      $region46: #{tpu_custom_call.1} parent=5 // pred_check_branch
        %359 = sbr.rel (%p357) target = $region48
      $region47: #{tpu_custom_call.1} parent=5 // pred_region
        %s360 = ssub.s32 %s16, 2
        // Predicated region
        $region49: #{tpu_custom_call.1} parent=47 // pred_check
          %p361 = pneg %p137
        $region50: #{tpu_custom_call.1} parent=47 // pred_check_branch
          %363 = sbr.rel (%p361) target = $region52
        $region51: #{tpu_custom_call.1} parent=47 // pred_region
          %s364 = sand.u32 %s122, 1
          %s365 = scalar_lea.sflag [#allocation4], %s364
          %s366 = sand.u32 %s122, 1
          %s367 = smul.addr %s366, 8
          %s368 = scalar_lea.vmem [#allocation7], %s367
          %369 = dma.done %s365, 128
        $region52: #{tpu_custom_call.1} parent=47 // pred_fallthru
          _
      $region48: #{tpu_custom_call.1} parent=5 // pred_fallthru
        _
    $region6: #{tpu_custom_call.1} parent=1 // loop_footer
      %s20 = sadd.s32 1, %s16
    $region7: #{tpu_custom_call.1} parent=1 // loop_footer_branch
      %15 = sbr.rel target = $region3
    $region8: #{tpu_custom_call.1} parent=1 // loop_exit
      _
    %370 = vsyncpa [#allocation3], 1
    %s371 = scalar_lea.sflag [#allocation3], 1
    %372 = vsyncpa %s371, 1
    %373 = vsyncpa [#allocation6], 1
    %374 = vsyncpa [#allocation4], 1
    %s375 = scalar_lea.sflag [#allocation4], 1
    %376 = vsyncpa %s375, 1

</llo_original>
